<compile_context>
chip_gen: v7x
topology: tpu7x:2x2x1
jax: 0.10.0
libtpu: 0.0.40
codegen_flags: <defaults>
</compile_context>

<pallas_src>
import functools
import math

import jax
import jax.numpy as jnp
from jax import lax
from jax.experimental import pallas as pl
from jax.experimental.pallas import tpu as pltpu

BN_EPS = 1e-5
_LANE = 128


# --------------------------------------------------------------------------- helpers
def _round_up(x, m):
    return ((x + m - 1) // m) * m


def _vmem_capacity_bytes():
    try:
        return int(pltpu.get_tpu_info().vmem_capacity_bytes)
    except Exception:
        return 64 * 1024 * 1024  # conservative fallback (v7x per-core VMEM)


def _pick_tiles(n, c, hwp, itemsize, max_block_bytes=2 * 1024 * 1024):
    """Pick a lane-dense spatial tile T (multiple of 128 dividing hwp) plus a batch
    fold Bn so one (Bn, C, T) block stays under max_block_bytes but is as large as
    possible (amortizes the ~0.35us/step grid overhead)."""
    max_t = max(_LANE, max_block_bytes // max(1, c * itemsize))
    t_best = _LANE
    t = _LANE
    while t <= hwp:
        if hwp % t == 0 and t <= max_t:
            t_best = t
        t += _LANE
    bn = 1
    for cand in range(1, n + 1):
        if n % cand == 0 and cand * c * t_best * itemsize <= max_block_bytes:
            bn = cand
    return bn, t_best


def _gram_update(xb_f32, sx, g, ones_col):
    """MXU-only stats update for one (C, T) chunk: per-channel sums + Gram of x."""
    sx = sx + jnp.dot(xb_f32, ones_col, preferred_element_type=jnp.float32)
    g = g + lax.dot_general(xb_f32, xb_f32, (((1,), (1,)), ((), ())),
                            preferred_element_type=jnp.float32)
    return sx, g


def _fused_scale_shift(w_f32, sx, g, gamma, beta, inv_m):
    """Fold training-mode BN into y*scale + shift, from sums/Gram of x:
       mean_y = W s / M,  E[y^2] = diag(W G W^T) / M."""
    mean = jnp.dot(w_f32, sx, preferred_element_type=jnp.float32) * inv_m
    ey2 = jnp.sum(jnp.dot(w_f32, g, preferred_element_type=jnp.float32) * w_f32,
                  axis=1, keepdims=True) * inv_m
    var = jnp.maximum(ey2 - mean * mean, 0.0)   # biased variance (BN training mode)
    rstd = lax.rsqrt(var + BN_EPS)
    scale = gamma * rstd
    shift = beta - mean * scale
    return scale, shift


# ------------------------------------------------------------------ fast-path kernel
def _fused_resident_kernel(x_ref, w_ref, gb_ref, o_ref, *,
                           n_batch, n_chunks, chunk, inv_m):
    """Gridless call: x_ref / o_ref are the full (N, C, HWp) slabs in VMEM, so x is
    read from HBM exactly once and the output written once (2 HBM passes total)."""
    c = w_ref.shape[0]
    w = w_ref[...]                                   # (C, C) f32, resident
    ones_col = jnp.ones((chunk, 1), jnp.float32)

    # Pass A: per-channel sums + Gram of x (MXU only), chunk by chunk out of VMEM.
    sx = jnp.zeros((c, 1), jnp.float32)
    g = jnp.zeros((c, c), jnp.float32)
    for nb in range(n_batch):                        # static unroll (fast path => small N)
        def stats_body(j, carry, nb=nb):
            sx_c, g_c = carry
            off = pl.multiple_of(j * chunk, _LANE)
            xb = x_ref[nb, :, pl.ds(off, chunk)].astype(jnp.float32)   # (C, chunk)
            return _gram_update(xb, sx_c, g_c, ones_col)
        sx, g = lax.fori_loop(0, n_chunks, stats_body, (sx, g))

    scale, shift = _fused_scale_shift(w, sx, g, gb_ref[:, 0:1], gb_ref[:, 1:2], inv_m)

    # Pass B: fused conv1x1 + BN + residual + ReLU, straight VMEM -> VMEM.
    for nb in range(n_batch):
        def apply_body(j, _, nb=nb):
            off = pl.multiple_of(j * chunk, _LANE)
            xb = x_ref[nb, :, pl.ds(off, chunk)].astype(jnp.float32)   # (C, chunk)
            y = jnp.dot(w, xb, preferred_element_type=jnp.float32)
            out = jnp.maximum(xb + y * scale + shift, 0.0)
            o_ref[nb, :, pl.ds(off, chunk)] = out.astype(o_ref.dtype)
            return 0
        lax.fori_loop(0, n_chunks, apply_body, 0)


# -------------------------------------------------------------- general-path kernels
def _stats_kernel(x_ref, sx_ref, g_ref):
    """Streaming per-channel sums + Gram of x; outputs are resident accumulators."""
    @pl.when(jnp.logical_and(pl.program_id(0) == 0, pl.program_id(1) == 0))
    def _init():
        sx_ref[...] = jnp.zeros_like(sx_ref)
        g_ref[...] = jnp.zeros_like(g_ref)

    ones_col = jnp.ones((x_ref.shape[2], 1), jnp.float32)
    sx = sx_ref[...]
    g = g_ref[...]
    for b in range(x_ref.shape[0]):                  # static: batch rows folded in block
        xb = x_ref[b].astype(jnp.float32)            # (C, T)
        sx, g = _gram_update(xb, sx, g, ones_col)
    sx_ref[...] = sx
    g_ref[...] = g


def _apply_kernel(x_ref, w_ref, ss_ref, o_ref):
    """Streaming fused conv1x1 + BN + residual + ReLU (grid fully parallel)."""
    w = w_ref[...]                                   # (C, C) f32, resident
    scale = ss_ref[:, 0:1]
    shift = ss_ref[:, 1:2]
    for b in range(x_ref.shape[0]):                  # static
        xb = x_ref[b].astype(jnp.float32)            # (C, T)
        y = jnp.dot(w, xb, preferred_element_type=jnp.float32)
        o_ref[b] = jnp.maximum(xb + y * scale + shift, 0.0).astype(o_ref.dtype)


# ------------------------------------------------------------------------ entry point
def writingnet_forward(x_nchw, w_conv, gamma, beta, *, force_general=False):
    """Writingnet forward: ReLU(x + BN(conv1x1(x))), training-mode batch statistics.

    x_nchw : (N, C, H, W) activations (f32 or bf16)
    w_conv : conv weight, (C, C) or (C, C, 1, 1)
    gamma, beta : (C,) BatchNorm affine parameters
    """
    n, c, h, w_sp = x_nchw.shape
    hw = h * w_sp
    m = n * hw
    inv_m = 1.0 / m
    dtype = x_nchw.dtype
    itemsize = jnp.dtype(dtype).itemsize

    w_f32 = w_conv.astype(jnp.float32).reshape(c, c)
    gamma_f32 = gamma.astype(jnp.float32).reshape(c, 1)
    beta_f32 = beta.astype(jnp.float32).reshape(c, 1)

    # Native NCHW view (free reshape) + zero-pad the spatial axis to a multiple of 128
    # so every tile/store stays lane-dense.  Zero padding does not perturb the BN
    # sums/Gram; the divisor stays the true M = N*H*W.
    x3 = x_nchw.reshape(n, c, hw)
    hwp = _round_up(hw, _LANE)
    if hwp != hw:
        x3 = jnp.pad(x3, ((0, 0), (0, 0), (0, hwp - hw)))

    vmem_cap = _vmem_capacity_bytes()
    x_bytes = n * c * hwp * itemsize
    # Fast path keeps both the input slab and the output slab resident in VMEM.
    use_fast = (not force_general) and n <= 256 and \
        (2 * x_bytes + (16 << 20) <= int(0.85 * vmem_cap))

    if use_fast:
        _, chunk = _pick_tiles(1, c, hwp, 4)         # chunk sized for f32 temporaries
        kernel = functools.partial(_fused_resident_kernel, n_batch=n,
                                   n_chunks=hwp // chunk, chunk=chunk, inv_m=inv_m)
        gb = jnp.concatenate([gamma_f32, beta_f32], axis=1)             # (C, 2)
        out3 = pl.pallas_call(
            kernel,
            out_shape=jax.ShapeDtypeStruct((n, c, hwp), dtype),
            compiler_params=pltpu.CompilerParams(
                vmem_limit_bytes=min(int(0.95 * vmem_cap),
                                     2 * x_bytes + (32 << 20)),
            ),
        )(x3, w_f32, gb)
    else:
        bn, t = _pick_tiles(n, c, hwp, itemsize)
        grid = (n // bn, hwp // t)
        block_bytes = bn * c * t * itemsize
        vmem_limit = min(int(0.95 * vmem_cap),
                         max(32 << 20, 8 * block_bytes + (8 << 20)))
        x_spec = pl.BlockSpec((bn, c, t), lambda i, j: (i, 0, j))

        # Pass 1: stream x once, accumulate per-channel sums + Gram (sequential grid).
        sx, g = pl.pallas_call(
            _stats_kernel,
            out_shape=(jax.ShapeDtypeStruct((c, 1), jnp.float32),
                       jax.ShapeDtypeStruct((c, c), jnp.float32)),
            grid=grid,
            in_specs=[x_spec],
            out_specs=(pl.BlockSpec((c, 1), lambda i, j: (0, 0)),
                       pl.BlockSpec((c, c), lambda i, j: (0, 0))),
            compiler_params=pltpu.CompilerParams(
                dimension_semantics=("arbitrary", "arbitrary"),
                vmem_limit_bytes=vmem_limit,
            ),
        )(x3)

        # Tiny BN finalize as plain XLA between the two calls.
        scale, shift = _fused_scale_shift(w_f32, sx, g, gamma_f32, beta_f32, inv_m)
        ss = jnp.concatenate([scale, shift], axis=1)                     # (C, 2)

        # Pass 2: stream x once more + write the output; both grid axes are
        # independent, so v7x's two TensorCores split this (dominant) pass.
        out3 = pl.pallas_call(
            _apply_kernel,
            out_shape=jax.ShapeDtypeStruct((n, c, hwp), dtype),
            grid=grid,
            in_specs=[x_spec,
                      pl.BlockSpec((c, c), lambda i, j: (0, 0)),
                      pl.BlockSpec((c, 2), lambda i, j: (0, 0))],
            out_specs=x_spec,
            compiler_params=pltpu.CompilerParams(
                dimension_semantics=("parallel", "parallel"),
                vmem_limit_bytes=vmem_limit,
            ),
        )(x3, w_f32, ss)

    if hwp != hw:
        out3 = out3[:, :, :hw]
    return out3.reshape(n, c, h, w_sp)


def reference_forward(x_nchw, w_conv, gamma, beta):
    """Pure-JAX (XLA) reference mirroring the PyTorch module, in f32."""
    n, c, h, w_sp = x_nchw.shape
    x = x_nchw.astype(jnp.float32)
    w = w_conv.astype(jnp.float32).reshape(c, c)
    y = jnp.einsum("oc,nchw->nohw", w, x, precision=lax.Precision.HIGHEST)
    mean = jnp.mean(y, axis=(0, 2, 3), keepdims=True)
    var = jnp.mean((y - mean) ** 2, axis=(0, 2, 3), keepdims=True)
    y_bn = (y - mean) * lax.rsqrt(var + BN_EPS)
    y_bn = y_bn * gamma.astype(jnp.float32).reshape(1, c, 1, 1) \
        + beta.astype(jnp.float32).reshape(1, c, 1, 1)
    return jnp.maximum(x + y_bn, 0.0)


# TODO(synk): training-mode BatchNorm also updates the running_mean / running_var
# module buffers; that state side effect does not affect the forward output and is
# not reproduced here.


if __name__ == "__main__":
    base_key = jax.random.PRNGKey(0)

    def run_case(idx, n, c, h, w_sp, dtype, force_general, atol, rtol):
        kx, kw = jax.random.split(jax.random.fold_in(base_key, idx))
        x = jax.random.normal(kx, (n, c, h, w_sp), dtype=jnp.float32).astype(dtype)
        # initialize_weights(): kaiming_normal_(relu) on the conv (fan_in = C*1*1),
        # BatchNorm weight = 1.0, bias = 0.0001.
        w_conv = math.sqrt(2.0 / c) * jax.random.normal(kw, (c, c), dtype=jnp.float32)
        gamma = jnp.ones((c,), jnp.float32)
        beta = jnp.full((c,), 1e-4, jnp.float32)

        out = writingnet_forward(x, w_conv, gamma, beta, force_general=force_general)
        out = jax.block_until_ready(out)
        assert out.shape == (n, c, h, w_sp)
        assert out.dtype == dtype

        ref = reference_forward(x.astype(jnp.float32), w_conv, gamma, beta)
        ok = bool(jnp.allclose(out.astype(jnp.float32), ref, atol=atol, rtol=rtol))
        assert ok, f"case {idx}: kernel output mismatch vs reference"

    # 1) f32, fast (fully VMEM-resident) path.
    run_case(0, 2, 32, 16, 16, jnp.float32, False, 1e-4, 1e-4)
    # 2) f32, streaming two-call path (stats accumulator + megacore-parallel apply).
    run_case(1, 2, 32, 16, 16, jnp.float32, True, 1e-4, 1e-4)
    # 3) f32, H*W not a multiple of 128 (exercises lane padding + batch folding).
    run_case(2, 2, 16, 10, 10, jnp.float32, True, 1e-4, 1e-4)
    # 4) bf16 I/O path (f32 accumulation / statistics inside the kernel).
    run_case(3, 2, 32, 16, 16, jnp.bfloat16, False, 5e-2, 5e-2)

    print("KERNEL_OK")
</pallas_src>

<mosaic_0001>
module attributes {stable_mosaic.version = 11 : i64} {
  func.func @_fused_resident_kernel(%arg0: memref<2x32x256xf32, #tpu.memory_space<vmem>>, %arg1: memref<32x32xf32, #tpu.memory_space<vmem>>, %arg2: memref<32x2xf32, #tpu.memory_space<vmem>>, %arg3: memref<2x32x256xf32, #tpu.memory_space<vmem>>) attributes {dimension_semantics = [], scalar_prefetch = 0 : i64, scratch_operands = 0 : i64, tpu.core_type = #tpu.core_type<tc>} {
    %c0 = arith.constant 0 : index
    %c0_0 = arith.constant 0 : index
    %0 = vector.load %arg1[%c0, %c0_0] : memref<32x32xf32, #tpu.memory_space<vmem>>, vector<32x32xf32>
    %cst = arith.constant 1.000000e+00 : f32
    %1 = vector.broadcast %cst : f32 to vector<256x1xf32>
    %cst_1 = arith.constant 0.000000e+00 : f32
    %2 = vector.broadcast %cst_1 : f32 to vector<32x1xf32>
    %cst_2 = arith.constant 0.000000e+00 : f32
    %3 = vector.broadcast %cst_2 : f32 to vector<32x32xf32>
    %c0_i32 = arith.constant 0 : i32
    %c256_i32 = arith.constant 256 : i32
    %4 = arith.muli %c0_i32, %c256_i32 : i32
    %5 = tpu.assume_multiple %4, 128 : i32
    %c0_3 = arith.constant 0 : index
    %c0_4 = arith.constant 0 : index
    %6 = arith.index_cast %5 : i32 to index
    %7 = vector.load %arg0[%c0_3, %c0_4, %6] : memref<2x32x256xf32, #tpu.memory_space<vmem>>, vector<1x32x256xf32>
    %8 = vector.shape_cast %7 : vector<1x32x256xf32> to vector<32x256xf32>
    %cst_5 = arith.constant dense<0.000000e+00> : vector<32x1xf32>
    %9 = tpu.matmul %8, %1, %cst_5 {dimension_numbers = #tpu.dot_dimension_numbers<[1], [0], [0], [1], [0, 0, 1, 1], [], []>} : vector<32x256xf32>, vector<256x1xf32>, vector<32x1xf32> -> vector<32x1xf32>
    %10 = arith.addf %2, %9 : vector<32x1xf32>
    %cst_6 = arith.constant dense<0.000000e+00> : vector<32x32xf32>
    %11 = tpu.matmul %8, %8, %cst_6 {dimension_numbers = #tpu.dot_dimension_numbers<[1], [1], [0], [0], [0, 0, 1, 0], [], []>} : vector<32x256xf32>, vector<32x256xf32>, vector<32x32xf32> -> vector<32x32xf32>
    %12 = arith.addf %3, %11 : vector<32x32xf32>
    %c1_i32 = arith.constant 1 : i32
    %c0_i32_7 = arith.constant 0 : i32
    %c256_i32_8 = arith.constant 256 : i32
    %13 = arith.muli %c0_i32_7, %c256_i32_8 : i32
    %14 = tpu.assume_multiple %13, 128 : i32
    %c1 = arith.constant 1 : index
    %c0_9 = arith.constant 0 : index
    %15 = arith.index_cast %14 : i32 to index
    %16 = vector.load %arg0[%c1, %c0_9, %15] : memref<2x32x256xf32, #tpu.memory_space<vmem>>, vector<1x32x256xf32>
    %17 = vector.shape_cast %16 : vector<1x32x256xf32> to vector<32x256xf32>
    %cst_10 = arith.constant dense<0.000000e+00> : vector<32x1xf32>
    %18 = tpu.matmul %17, %1, %cst_10 {dimension_numbers = #tpu.dot_dimension_numbers<[1], [0], [0], [1], [0, 0, 1, 1], [], []>} : vector<32x256xf32>, vector<256x1xf32>, vector<32x1xf32> -> vector<32x1xf32>
    %19 = arith.addf %10, %18 : vector<32x1xf32>
    %cst_11 = arith.constant dense<0.000000e+00> : vector<32x32xf32>
    %20 = tpu.matmul %17, %17, %cst_11 {dimension_numbers = #tpu.dot_dimension_numbers<[1], [1], [0], [0], [0, 0, 1, 0], [], []>} : vector<32x256xf32>, vector<32x256xf32>, vector<32x32xf32> -> vector<32x32xf32>
    %21 = arith.addf %12, %20 : vector<32x32xf32>
    %c1_i32_12 = arith.constant 1 : i32
    %c0_13 = arith.constant 0 : index
    %c0_14 = arith.constant 0 : index
    %22 = vector.load %arg2[%c0_13, %c0_14] : memref<32x2xf32, #tpu.memory_space<vmem>>, vector<32x1xf32>
    %c0_15 = arith.constant 0 : index
    %c1_16 = arith.constant 1 : index
    %23 = vector.load %arg2[%c0_15, %c1_16] : memref<32x2xf32, #tpu.memory_space<vmem>>, vector<32x1xf32>
    %cst_17 = arith.constant dense<0.000000e+00> : vector<32x1xf32>
    %24 = tpu.matmul %0, %19, %cst_17 {dimension_numbers = #tpu.dot_dimension_numbers<[1], [0], [0], [1], [0, 0, 1, 1], [], []>} : vector<32x32xf32>, vector<32x1xf32>, vector<32x1xf32> -> vector<32x1xf32>
    %cst_18 = arith.constant 0.001953125 : f32
    %25 = vector.broadcast %cst_18 : f32 to vector<32x1xf32>
    %26 = arith.mulf %24, %25 : vector<32x1xf32>
    %cst_19 = arith.constant dense<0.000000e+00> : vector<32x32xf32>
    %27 = tpu.matmul %0, %21, %cst_19 {dimension_numbers = #tpu.dot_dimension_numbers<[1], [0], [0], [1], [0, 0, 1, 1], [], []>} : vector<32x32xf32>, vector<32x32xf32>, vector<32x32xf32> -> vector<32x32xf32>
    %28 = arith.mulf %27, %0 : vector<32x32xf32>
    %cst_20 = arith.constant dense<0.000000e+00> : vector<32xf32>
    %29 = vector.multi_reduction <add>, %28, %cst_20 [1] : vector<32x32xf32> to vector<32xf32>
    %30 = vector.shape_cast %29 : vector<32xf32> to vector<32x1xf32>
    %cst_21 = arith.constant 0.001953125 : f32
    %31 = vector.broadcast %cst_21 : f32 to vector<32x1xf32>
    %32 = arith.mulf %30, %31 : vector<32x1xf32>
    %33 = arith.mulf %26, %26 : vector<32x1xf32>
    %34 = arith.subf %32, %33 : vector<32x1xf32>
    %cst_22 = arith.constant 0.000000e+00 : f32
    %35 = vector.broadcast %cst_22 : f32 to vector<32x1xf32>
    %36 = arith.maximumf %34, %35 : vector<32x1xf32>
    %cst_23 = arith.constant 9.99999974E-6 : f32
    %37 = vector.broadcast %cst_23 : f32 to vector<32x1xf32>
    %38 = arith.addf %36, %37 : vector<32x1xf32>
    %39 = math.rsqrt %38 : vector<32x1xf32>
    %40 = arith.mulf %22, %39 : vector<32x1xf32>
    %41 = arith.mulf %26, %40 : vector<32x1xf32>
    %42 = arith.subf %23, %41 : vector<32x1xf32>
    %c0_i32_24 = arith.constant 0 : i32
    %c256_i32_25 = arith.constant 256 : i32
    %43 = arith.muli %c0_i32_24, %c256_i32_25 : i32
    %44 = tpu.assume_multiple %43, 128 : i32
    %c0_26 = arith.constant 0 : index
    %c0_27 = arith.constant 0 : index
    %45 = arith.index_cast %44 : i32 to index
    %46 = vector.load %arg0[%c0_26, %c0_27, %45] : memref<2x32x256xf32, #tpu.memory_space<vmem>>, vector<1x32x256xf32>
    %47 = vector.shape_cast %46 : vector<1x32x256xf32> to vector<32x256xf32>
    %cst_28 = arith.constant dense<0.000000e+00> : vector<32x256xf32>
    %48 = tpu.matmul %0, %47, %cst_28 {dimension_numbers = #tpu.dot_dimension_numbers<[1], [0], [0], [1], [0, 0, 1, 1], [], []>} : vector<32x32xf32>, vector<32x256xf32>, vector<32x256xf32> -> vector<32x256xf32>
    %49 = vector.broadcast %40 : vector<32x1xf32> to vector<32x256xf32>
    %50 = arith.mulf %48, %49 : vector<32x256xf32>
    %51 = arith.addf %47, %50 : vector<32x256xf32>
    %52 = vector.broadcast %42 : vector<32x1xf32> to vector<32x256xf32>
    %53 = arith.addf %51, %52 : vector<32x256xf32>
    %cst_29 = arith.constant 0.000000e+00 : f32
    %54 = vector.broadcast %cst_29 : f32 to vector<32x256xf32>
    %55 = arith.maximumf %53, %54 : vector<32x256xf32>
    %c0_30 = arith.constant 0 : index
    %c0_31 = arith.constant 0 : index
    %56 = arith.index_cast %44 : i32 to index
    %57 = vector.load %arg3[%c0_30, %c0_31, %56] : memref<2x32x256xf32, #tpu.memory_space<vmem>>, vector<1x32x256xf32>
    %58 = vector.shape_cast %57 : vector<1x32x256xf32> to vector<32x256xf32>
    %59 = vector.shape_cast %55 : vector<32x256xf32> to vector<1x32x256xf32>
    tpu.vector_store %arg3[%c0_30, %c0_31, %56], %59 {strides = array<i32>} : memref<2x32x256xf32, #tpu.memory_space<vmem>>, vector<1x32x256xf32>,
    %c1_i32_32 = arith.constant 1 : i32
    %c0_i32_33 = arith.constant 0 : i32
    %c256_i32_34 = arith.constant 256 : i32
    %60 = arith.muli %c0_i32_33, %c256_i32_34 : i32
    %61 = tpu.assume_multiple %60, 128 : i32
    %c1_35 = arith.constant 1 : index
    %c0_36 = arith.constant 0 : index
    %62 = arith.index_cast %61 : i32 to index
    %63 = vector.load %arg0[%c1_35, %c0_36, %62] : memref<2x32x256xf32, #tpu.memory_space<vmem>>, vector<1x32x256xf32>
    %64 = vector.shape_cast %63 : vector<1x32x256xf32> to vector<32x256xf32>
    %cst_37 = arith.constant dense<0.000000e+00> : vector<32x256xf32>
    %65 = tpu.matmul %0, %64, %cst_37 {dimension_numbers = #tpu.dot_dimension_numbers<[1], [0], [0], [1], [0, 0, 1, 1], [], []>} : vector<32x32xf32>, vector<32x256xf32>, vector<32x256xf32> -> vector<32x256xf32>
    %66 = vector.broadcast %40 : vector<32x1xf32> to vector<32x256xf32>
    %67 = arith.mulf %65, %66 : vector<32x256xf32>
    %68 = arith.addf %64, %67 : vector<32x256xf32>
    %69 = vector.broadcast %42 : vector<32x1xf32> to vector<32x256xf32>
    %70 = arith.addf %68, %69 : vector<32x256xf32>
    %cst_38 = arith.constant 0.000000e+00 : f32
    %71 = vector.broadcast %cst_38 : f32 to vector<32x256xf32>
    %72 = arith.maximumf %70, %71 : vector<32x256xf32>
    %c1_39 = arith.constant 1 : index
    %c0_40 = arith.constant 0 : index
    %73 = arith.index_cast %61 : i32 to index
    %74 = vector.load %arg3[%c1_39, %c0_40, %73] : memref<2x32x256xf32, #tpu.memory_space<vmem>>, vector<1x32x256xf32>
    %75 = vector.shape_cast %74 : vector<1x32x256xf32> to vector<32x256xf32>
    %76 = vector.shape_cast %72 : vector<32x256xf32> to vector<1x32x256xf32>
    tpu.vector_store %arg3[%c1_39, %c0_40, %73], %76 {strides = array<i32>} : memref<2x32x256xf32, #tpu.memory_space<vmem>>, vector<1x32x256xf32>,
    %c1_i32_41 = arith.constant 1 : i32
    return
  }
}

</mosaic_0001>

<llo_original>
// kernel: tpu_custom_call.1
$region0: #{tpu_custom_call.1}
  #allocation0 [shape = 'u32[]', space=smem, size = 0x4, offset = 0x4, fixed_abs, tag = 'smem constant byte address 0x4 - core index']
  #allocation1 [shape = 'u32[144,128]{1,0:T(1,128)}', space=vmem, size = 0x12000, scoped, tag = 'internal scratch']
  %s0 = inlined_call_operand.hbm [shape: f32[2,32,256], index: 0, kind: input, shape index: {}]
  %s1 = inlined_call_operand.vmem [shape: f32[32,32], index: 1, kind: input, shape index: {}]
  %s2 = inlined_call_operand.vmem [shape: f32[32,2], index: 2, kind: input, shape index: {}]
  %s3 = inlined_call_operand.hbm [shape: f32[2,32,256], index: 3, kind: output, shape index: {}]
  %s4 = sld [smem:[#allocation0]]
  $region26: #{tpu_custom_call.1} parent=0
    _
  %s6 = ssub.s32 1, %s4
  %s7 = scalar_select 0, %s6, %s4
  $region1: #{tpu_custom_call.1} parent=0
    #allocation2 [shape = 'u8[65536]{0}', space=vmem, size = 0x10000, scoped, tag = 'input window, operand 0, single buffered']
    #allocation3 [shape = 's32[1]{0}', space=sflag, size = 0x4, scoped, tag = 'scoped memory for tpu_custom_call.1']
    #allocation4 [shape = 's32[1]{0}', space=sflag, size = 0x4, scoped, tag = 'scoped memory for tpu_custom_call.1']
    #allocation5 [shape = 'u8[65536]{0}', space=vmem, size = 0x10000, scoped, tag = 'output window, operand 0, single buffered']
    %8 = vsyncpa [#allocation3], 0
    %9 = vsyncpa [#allocation4], 0
    // Predicated region
    $region2: #{tpu_custom_call.1} parent=1 // pred_check
      _
    $region3: #{tpu_custom_call.1} parent=1 // pred_check_branch
      %11 = sbr.rel (0) target = $region5
    $region4: #{tpu_custom_call.1} parent=1 // pred_region
      %s13 = ssub.s32 2048, 2048
      %14 = vsyncadd [#allocation3], %s13
      %s15 = sshll.u32 [#allocation2], 4
      %s16 = int_to_ptr.vmem [resolvable:$true] %s15
      %21 = dma.hbm_to_vmem [thread:$0]  %s0, 2048, %s16, [#allocation3], 256, 256, 16
    $region5: #{tpu_custom_call.1} parent=1 // pred_fallthru
      _
    // Predicated region
    $region6: #{tpu_custom_call.1} parent=1 // pred_check
      _
    $region7: #{tpu_custom_call.1} parent=1 // pred_check_branch
      %23 = sbr.rel (0) target = $region9
    $region8: #{tpu_custom_call.1} parent=1 // pred_region
      _
    $region9: #{tpu_custom_call.1} parent=1 // pred_fallthru
      _
    // Predicated region
    $region10: #{tpu_custom_call.1} parent=1 // pred_check
      _
    $region11: #{tpu_custom_call.1} parent=1 // pred_check_branch
      %25 = sbr.rel (0) target = $region13
    $region12: #{tpu_custom_call.1} parent=1 // pred_region
      _
    $region13: #{tpu_custom_call.1} parent=1 // pred_fallthru
      _
    // Predicated region
    $region14: #{tpu_custom_call.1} parent=1 // pred_check
      _
    $region15: #{tpu_custom_call.1} parent=1 // pred_check_branch
      %27 = sbr.rel (0) target = $region17
    $region16: #{tpu_custom_call.1} parent=1 // pred_region
      %28 = dma.done [#allocation3], 2048
    $region17: #{tpu_custom_call.1} parent=1 // pred_fallthru
      _
    %v29 = vld [vmem:[%s1] sm:$0xff]
    %v30 = vld [vmem:[%s1 + $0x8] sm:$0xff]
    %v31 = vld [vmem:[%s1 + $0x10] sm:$0xff]
    %v32 = vld [vmem:[%s1 + $0x18] sm:$0xff]
    %v33 = vld [vmem:[#allocation2] sm:$0xff]
    %v34 = vld [vmem:[#allocation2 + $0x8] sm:$0xff]
    %v35 = vld [vmem:[#allocation2 + $0x10] sm:$0xff]
    %v36 = vld [vmem:[#allocation2 + $0x18] sm:$0xff]
    %v37 = vld [vmem:[#allocation2 + $0x20] sm:$0xff]
    %v38 = vld [vmem:[#allocation2 + $0x28] sm:$0xff]
    %v39 = vld [vmem:[#allocation2 + $0x30] sm:$0xff]
    %v40 = vld [vmem:[#allocation2 + $0x38] sm:$0xff]
    %s41 = sadd.s32 0, 8
    %s42 = smul.addr %s41, 8
    %s43 = scalar_lea.vmem [#allocation2], %s42
    %v44 = vld [vmem:[%s43] sm:$0xff]
    %v45 = vld [vmem:[%s43 + $0x8] sm:$0xff]
    %v46 = vld [vmem:[%s43 + $0x10] sm:$0xff]
    %v47 = vld [vmem:[%s43 + $0x18] sm:$0xff]
    %v48 = vld [vmem:[%s43 + $0x20] sm:$0xff]
    %v49 = vld [vmem:[%s43 + $0x28] sm:$0xff]
    %v50 = vld [vmem:[%s43 + $0x30] sm:$0xff]
    %v51 = vld [vmem:[%s43 + $0x38] sm:$0xff]
    %52 = vmatprep.subr.mxu0 0.0
    %53 = vmatpush1.msra.mxu0 1.0
    %54 = vmatprep.subr.mxu0 0.0
    %55 = vmatpush1.msra.mxu0 1.0
    %56 = vmatprep.subr.mxu0 0.0
    %57 = vmatpush1.msra.mxu0 1.0
    %58 = vmatprep.subr.mxu0 0.0
    %59 = vmatpush1.msra.mxu0 1.0
    %60 = vmatprep.subr.mxu0 0.0
    %61 = vmatpush1.msra.mxu0 1.0
    %62 = vmatprep.subr.mxu0 0.0
    %63 = vmatpush1.msra.mxu0 1.0
    %64 = vmatprep.subr.mxu0 0.0
    %65 = vmatpush1.msra.mxu0 1.0
    %66 = vmatprep.subr.mxu0 0.0
    %67 = vmatpush1.msra.mxu0 1.0
    %68 = vmatprep.subr.mxu0 0.0
    %69 = vmatpush1.msra.mxu0 1.0
    %70 = vmatprep.subr.mxu0 0.0
    %71 = vmatpush1.msra.mxu0 1.0
    %72 = vmatprep.subr.mxu0 0.0
    %73 = vmatpush1.msra.mxu0 1.0
    %74 = vmatprep.subr.mxu0 0.0
    %75 = vmatpush1.msra.mxu0 1.0
    %76 = vmatprep.subr.mxu0 0.0
    %77 = vmatpush1.msra.mxu0 1.0
    %78 = vmatprep.subr.mxu0 0.0
    %79 = vmatpush1.msra.mxu0 1.0
    %80 = vmatprep.subr.mxu0 0.0
    %81 = vmatpush1.msra.mxu0 1.0
    %82 = vmatprep.subr.mxu0 0.0
    %83 = vmatpush1.msra.mxu0 1.0
    %84 = vmatprep.subr.mxu0 0.0
    %85 = vmatpush1.msra.mxu0 1.0
    %86 = vmatprep.subr.mxu0 0.0
    %87 = vmatpush1.msra.mxu0 1.0
    %88 = vmatprep.subr.mxu0 0.0
    %89 = vmatpush1.msra.mxu0 1.0
    %90 = vmatprep.subr.mxu0 0.0
    %91 = vmatpush1.msra.mxu0 1.0
    %92 = vmatprep.subr.mxu0 0.0
    %93 = vmatpush1.msra.mxu0 1.0
    %94 = vmatprep.subr.mxu0 0.0
    %95 = vmatpush1.msra.mxu0 1.0
    %96 = vmatprep.subr.mxu0 0.0
    %97 = vmatpush1.msra.mxu0 1.0
    %98 = vmatprep.subr.mxu0 0.0
    %99 = vmatpush1.msra.mxu0 1.0
    %100 = vmatprep.subr.mxu0 0.0
    %101 = vmatpush1.msra.mxu0 1.0
    %102 = vmatprep.subr.mxu0 0.0
    %103 = vmatpush1.msra.mxu0 1.0
    %104 = vmatprep.subr.mxu0 0.0
    %105 = vmatpush1.msra.mxu0 1.0
    %106 = vmatprep.subr.mxu0 0.0
    %107 = vmatpush1.msra.mxu0 1.0
    %108 = vmatprep.subr.mxu0 0.0
    %109 = vmatpush1.msra.mxu0 1.0
    %110 = vmatprep.subr.mxu0 0.0
    %111 = vmatpush1.msra.mxu0 1.0
    %112 = vmatprep.subr.mxu0 0.0
    %113 = vmatpush1.msra.mxu0 1.0
    %114 = vmatprep.subr.mxu0 0.0
    %115 = vmatpush1.msra.mxu0 1.0
    %116 = vmatprep.mubr.f32.mxu0 %v45
    %117 = vmatmul.mubr.f32.gmra.mrb[0].mxu0 %v44
    %v118 = vpop.f32.mrb[0].mxu0
    %v119 = vadd.f32 0.0, %v118
    %v120 = vpop.f32.mrb[0].mxu0
    %121 = vmatprep.mubr.f32.mxu0 %v47
    %122 = vmatmul.mubr.f32.gmra.mrb[0].mxu0 %v46
    %v123 = vpop.f32.mrb[0].mxu0
    %v124 = vadd.f32 0.0, %v123
    %v125 = vpop.f32.mrb[0].mxu0
    %126 = vmatprep.mubr.f32.mxu0 %v49
    %127 = vmatmul.mubr.f32.gmra.mrb[0].mxu0 %v48
    %v128 = vpop.f32.mrb[0].mxu0
    %v129 = vadd.f32 0.0, %v128
    %v130 = vpop.f32.mrb[0].mxu0
    %131 = vmatprep.mubr.f32.mxu0 %v51
    %132 = vmatmul.mubr.f32.gmra.mrb[0].mxu0 %v50
    %v133 = vpop.f32.mrb[0].mxu0
    %v134 = vadd.f32 0.0, %v133
    %v135 = vpop.f32.mrb[0].mxu0
    %136 = vdwg.mxu0
    %137 = vmatprep.subr.mxu0 0.0
    %138 = vmatpush1.msra.mxu0 1.0
    %139 = vmatprep.subr.mxu0 0.0
    %140 = vmatpush1.msra.mxu0 1.0
    %141 = vmatprep.subr.mxu0 0.0
    %142 = vmatpush1.msra.mxu0 1.0
    %143 = vmatprep.subr.mxu0 0.0
    %144 = vmatpush1.msra.mxu0 1.0
    %145 = vmatprep.subr.mxu0 0.0
    %146 = vmatpush1.msra.mxu0 1.0
    %147 = vmatprep.subr.mxu0 0.0
    %148 = vmatpush1.msra.mxu0 1.0
    %149 = vmatprep.subr.mxu0 0.0
    %150 = vmatpush1.msra.mxu0 1.0
    %151 = vmatprep.subr.mxu0 0.0
    %152 = vmatpush1.msra.mxu0 1.0
    %153 = vmatprep.subr.mxu0 0.0
    %154 = vmatpush1.msra.mxu0 1.0
    %155 = vmatprep.subr.mxu0 0.0
    %156 = vmatpush1.msra.mxu0 1.0
    %157 = vmatprep.subr.mxu0 0.0
    %158 = vmatpush1.msra.mxu0 1.0
    %159 = vmatprep.subr.mxu0 0.0
    %160 = vmatpush1.msra.mxu0 1.0
    %161 = vmatprep.subr.mxu0 0.0
    %162 = vmatpush1.msra.mxu0 1.0
    %163 = vmatprep.subr.mxu0 0.0
    %164 = vmatpush1.msra.mxu0 1.0
    %165 = vmatprep.subr.mxu0 0.0
    %166 = vmatpush1.msra.mxu0 1.0
    %167 = vmatprep.subr.mxu0 0.0
    %168 = vmatpush1.msra.mxu0 1.0
    %169 = vmatprep.subr.mxu0 0.0
    %170 = vmatpush1.msra.mxu0 1.0
    %171 = vmatprep.subr.mxu0 0.0
    %172 = vmatpush1.msra.mxu0 1.0
    %173 = vmatprep.subr.mxu0 0.0
    %174 = vmatpush1.msra.mxu0 1.0
    %175 = vmatprep.subr.mxu0 0.0
    %176 = vmatpush1.msra.mxu0 1.0
    %177 = vmatprep.subr.mxu0 0.0
    %178 = vmatpush1.msra.mxu0 1.0
    %179 = vmatprep.subr.mxu0 0.0
    %180 = vmatpush1.msra.mxu0 1.0
    %181 = vmatprep.subr.mxu0 0.0
    %182 = vmatpush1.msra.mxu0 1.0
    %183 = vmatprep.subr.mxu0 0.0
    %184 = vmatpush1.msra.mxu0 1.0
    %185 = vmatprep.subr.mxu0 0.0
    %186 = vmatpush1.msra.mxu0 1.0
    %187 = vmatprep.subr.mxu0 0.0
    %188 = vmatpush1.msra.mxu0 1.0
    %189 = vmatprep.subr.mxu0 0.0
    %190 = vmatpush1.msra.mxu0 1.0
    %191 = vmatprep.subr.mxu0 0.0
    %192 = vmatpush1.msra.mxu0 1.0
    %193 = vmatprep.subr.mxu0 0.0
    %194 = vmatpush1.msra.mxu0 1.0
    %195 = vmatprep.subr.mxu0 0.0
    %196 = vmatpush1.msra.mxu0 1.0
    %197 = vmatprep.subr.mxu0 0.0
    %198 = vmatpush1.msra.mxu0 1.0
    %199 = vmatprep.subr.mxu0 0.0
    %200 = vmatpush1.msra.mxu0 1.0
    %201 = vmatprep.mubr.f32.mxu0 %v34
    %202 = vmatmul.mubr.f32.gmra.mrb[0].mxu0 %v33
    %v203 = vpop.f32.mrb[0].mxu0
    %v204 = vadd.f32 %v119, %v203
    %v205 = vpop.f32.mrb[0].mxu0
    %206 = vmatprep.mubr.f32.mxu0 %v36
    %207 = vmatmul.mubr.f32.gmra.mrb[0].mxu0 %v35
    %v208 = vpop.f32.mrb[0].mxu0
    %v209 = vadd.f32 %v124, %v208
    %v210 = vpop.f32.mrb[0].mxu0
    %211 = vmatprep.mubr.f32.mxu0 %v38
    %212 = vmatmul.mubr.f32.gmra.mrb[0].mxu0 %v37
    %v213 = vpop.f32.mrb[0].mxu0
    %v214 = vadd.f32 %v129, %v213
    %v215 = vpop.f32.mrb[0].mxu0
    %216 = vmatprep.mubr.f32.mxu0 %v40
    %217 = vmatmul.mubr.f32.gmra.mrb[0].mxu0 %v39
    %v218 = vpop.f32.mrb[0].mxu0
    %v219 = vadd.f32 %v134, %v218
    %v220 = vpop.f32.mrb[0].mxu0
    %221 = vdwg.mxu0
    %222 = vmatprep.subr.mxu0 %v45
    %223 = vmatpush1.xpose.msra.mxu0 %v44
    %224 = vmatprep.subr.mxu0 %v47
    %225 = vmatpush1.xpose.msra.mxu0 %v46
    %226 = vmatprep.subr.mxu0 %v49
    %227 = vmatpush1.xpose.msra.mxu0 %v48
    %228 = vmatprep.subr.mxu0 %v51
    %229 = vmatpush1.xpose.msra.mxu0 %v50
    %230 = vmatprep.subr.mxu0 0.0
    %231 = vmatpush1.xpose.msra.mxu0 0.0
    %232 = vmatprep.subr.mxu0 0.0
    %233 = vmatpush1.xpose.msra.mxu0 0.0
    %234 = vmatprep.subr.mxu0 0.0
    %235 = vmatpush1.xpose.msra.mxu0 0.0
    %236 = vmatprep.subr.mxu0 0.0
    %237 = vmatpush1.xpose.msra.mxu0 0.0
    %238 = vmatprep.subr.mxu0 0.0
    %239 = vmatpush1.xpose.msra.mxu0 0.0
    %240 = vmatprep.subr.mxu0 0.0
    %241 = vmatpush1.xpose.msra.mxu0 0.0
    %242 = vmatprep.subr.mxu0 0.0
    %243 = vmatpush1.xpose.msra.mxu0 0.0
    %244 = vmatprep.subr.mxu0 0.0
    %245 = vmatpush1.xpose.msra.mxu0 0.0
    %246 = vmatprep.subr.mxu0 0.0
    %247 = vmatpush1.xpose.msra.mxu0 0.0
    %248 = vmatprep.subr.mxu0 0.0
    %249 = vmatpush1.xpose.msra.mxu0 0.0
    %250 = vmatprep.subr.mxu0 0.0
    %251 = vmatpush1.xpose.msra.mxu0 0.0
    %252 = vmatprep.subr.mxu0 0.0
    %253 = vmatpush1.xpose.msra.mxu0 0.0
    %254 = vmatprep.subr.mxu0 0.0
    %255 = vmatpush1.xpose.msra.mxu0 0.0
    %256 = vmatprep.subr.mxu0 0.0
    %257 = vmatpush1.xpose.msra.mxu0 0.0
    %258 = vmatprep.subr.mxu0 0.0
    %259 = vmatpush1.xpose.msra.mxu0 0.0
    %260 = vmatprep.subr.mxu0 0.0
    %261 = vmatpush1.xpose.msra.mxu0 0.0
    %262 = vmatprep.subr.mxu0 0.0
    %263 = vmatpush1.xpose.msra.mxu0 0.0
    %264 = vmatprep.subr.mxu0 0.0
    %265 = vmatpush1.xpose.msra.mxu0 0.0
    %266 = vmatprep.subr.mxu0 0.0
    %267 = vmatpush1.xpose.msra.mxu0 0.0
    %268 = vmatprep.subr.mxu0 0.0
    %269 = vmatpush1.xpose.msra.mxu0 0.0
    %270 = vmatprep.subr.mxu0 0.0
    %271 = vmatpush1.xpose.msra.mxu0 0.0
    %272 = vmatprep.subr.mxu0 0.0
    %273 = vmatpush1.xpose.msra.mxu0 0.0
    %274 = vmatprep.subr.mxu0 0.0
    %275 = vmatpush1.xpose.msra.mxu0 0.0
    %276 = vmatprep.subr.mxu0 0.0
    %277 = vmatpush1.xpose.msra.mxu0 0.0
    %278 = vmatprep.subr.mxu0 0.0
    %279 = vmatpush1.xpose.msra.mxu0 0.0
    %280 = vmatprep.subr.mxu0 0.0
    %281 = vmatpush1.xpose.msra.mxu0 0.0
    %282 = vmatprep.subr.mxu0 0.0
    %283 = vmatpush1.xpose.msra.mxu0 0.0
    %284 = vmatprep.subr.mxu0 0.0
    %285 = vmatpush1.xpose.msra.mxu0 0.0
    %286 = vmatprep.mubr.f32.mxu0 %v45
    %287 = vmatmul.mubr.f32.gmra.mrb[0].mxu0 %v44
    %v288 = vpop.f32.mrb[0].mxu0
    %v289 = vadd.f32 0.0, %v288
    %v290 = vpop.f32.mrb[0].mxu0
    %291 = vmatprep.mubr.f32.mxu0 %v47
    %292 = vmatmul.mubr.f32.gmra.mrb[0].mxu0 %v46
    %v293 = vpop.f32.mrb[0].mxu0
    %v294 = vadd.f32 0.0, %v293
    %v295 = vpop.f32.mrb[0].mxu0
    %296 = vmatprep.mubr.f32.mxu0 %v49
    %297 = vmatmul.mubr.f32.gmra.mrb[0].mxu0 %v48
    %v298 = vpop.f32.mrb[0].mxu0
    %v299 = vadd.f32 0.0, %v298
    %v300 = vpop.f32.mrb[0].mxu0
    %301 = vmatprep.mubr.f32.mxu0 %v51
    %302 = vmatmul.mubr.f32.gmra.mrb[0].mxu0 %v50
    %v303 = vpop.f32.mrb[0].mxu0
    %v304 = vadd.f32 0.0, %v303
    %v305 = vpop.f32.mrb[0].mxu0
    %306 = vdwg.mxu0
    %307 = vmatprep.subr.mxu0 %v34
    %308 = vmatpush1.xpose.msra.mxu0 %v33
    %309 = vmatprep.subr.mxu0 %v36
    %310 = vmatpush1.xpose.msra.mxu0 %v35
    %311 = vmatprep.subr.mxu0 %v38
    %312 = vmatpush1.xpose.msra.mxu0 %v37
    %313 = vmatprep.subr.mxu0 %v40
    %314 = vmatpush1.xpose.msra.mxu0 %v39
    %315 = vmatprep.subr.mxu0 0.0
    %316 = vmatpush1.xpose.msra.mxu0 0.0
    %317 = vmatprep.subr.mxu0 0.0
    %318 = vmatpush1.xpose.msra.mxu0 0.0
    %319 = vmatprep.subr.mxu0 0.0
    %320 = vmatpush1.xpose.msra.mxu0 0.0
    %321 = vmatprep.subr.mxu0 0.0
    %322 = vmatpush1.xpose.msra.mxu0 0.0
    %323 = vmatprep.subr.mxu0 0.0
    %324 = vmatpush1.xpose.msra.mxu0 0.0
    %325 = vmatprep.subr.mxu0 0.0
    %326 = vmatpush1.xpose.msra.mxu0 0.0
    %327 = vmatprep.subr.mxu0 0.0
    %328 = vmatpush1.xpose.msra.mxu0 0.0
    %329 = vmatprep.subr.mxu0 0.0
    %330 = vmatpush1.xpose.msra.mxu0 0.0
    %331 = vmatprep.subr.mxu0 0.0
    %332 = vmatpush1.xpose.msra.mxu0 0.0
    %333 = vmatprep.subr.mxu0 0.0
    %334 = vmatpush1.xpose.msra.mxu0 0.0
    %335 = vmatprep.subr.mxu0 0.0
    %336 = vmatpush1.xpose.msra.mxu0 0.0
    %337 = vmatprep.subr.mxu0 0.0
    %338 = vmatpush1.xpose.msra.mxu0 0.0
    %339 = vmatprep.subr.mxu0 0.0
    %340 = vmatpush1.xpose.msra.mxu0 0.0
    %341 = vmatprep.subr.mxu0 0.0
    %342 = vmatpush1.xpose.msra.mxu0 0.0
    %343 = vmatprep.subr.mxu0 0.0
    %344 = vmatpush1.xpose.msra.mxu0 0.0
    %345 = vmatprep.subr.mxu0 0.0
    %346 = vmatpush1.xpose.msra.mxu0 0.0
    %347 = vmatprep.subr.mxu0 0.0
    %348 = vmatpush1.xpose.msra.mxu0 0.0
    %349 = vmatprep.subr.mxu0 0.0
    %350 = vmatpush1.xpose.msra.mxu0 0.0
    %351 = vmatprep.subr.mxu0 0.0
    %352 = vmatpush1.xpose.msra.mxu0 0.0
    %353 = vmatprep.subr.mxu0 0.0
    %354 = vmatpush1.xpose.msra.mxu0 0.0
    %355 = vmatprep.subr.mxu0 0.0
    %356 = vmatpush1.xpose.msra.mxu0 0.0
    %357 = vmatprep.subr.mxu0 0.0
    %358 = vmatpush1.xpose.msra.mxu0 0.0
    %359 = vmatprep.subr.mxu0 0.0
    %360 = vmatpush1.xpose.msra.mxu0 0.0
    %361 = vmatprep.subr.mxu0 0.0
    %362 = vmatpush1.xpose.msra.mxu0 0.0
    %363 = vmatprep.subr.mxu0 0.0
    %364 = vmatpush1.xpose.msra.mxu0 0.0
    %365 = vmatprep.subr.mxu0 0.0
    %366 = vmatpush1.xpose.msra.mxu0 0.0
    %367 = vmatprep.subr.mxu0 0.0
    %368 = vmatpush1.xpose.msra.mxu0 0.0
    %369 = vmatprep.subr.mxu0 0.0
    %370 = vmatpush1.xpose.msra.mxu0 0.0
    %371 = vmatprep.mubr.f32.mxu0 %v34
    %372 = vmatmul.mubr.f32.gmra.mrb[0].mxu0 %v33
    %v373 = vpop.f32.mrb[0].mxu0
    %v374 = vadd.f32 %v289, %v373
    %v375 = vpop.f32.mrb[0].mxu0
    %376 = vmatprep.mubr.f32.mxu0 %v36
    %377 = vmatmul.mubr.f32.gmra.mrb[0].mxu0 %v35
    %v378 = vpop.f32.mrb[0].mxu0
    %v379 = vadd.f32 %v294, %v378
    %v380 = vpop.f32.mrb[0].mxu0
    %381 = vmatprep.mubr.f32.mxu0 %v38
    %382 = vmatmul.mubr.f32.gmra.mrb[0].mxu0 %v37
    %v383 = vpop.f32.mrb[0].mxu0
    %v384 = vadd.f32 %v299, %v383
    %v385 = vpop.f32.mrb[0].mxu0
    %386 = vmatprep.mubr.f32.mxu0 %v40
    %387 = vmatmul.mubr.f32.gmra.mrb[0].mxu0 %v39
    %v388 = vpop.f32.mrb[0].mxu0
    %v389 = vadd.f32 %v304, %v388
    %v390 = vpop.f32.mrb[0].mxu0
    %391 = vdwg.mxu0
    %v392 = vld [vmem:[%s2] sm:$0xff]
    %v393 = vld [vmem:[%s2 + $0x8] sm:$0xff]
    %v394 = vld [vmem:[%s2 + $0x10] sm:$0xff]
    %v395 = vld [vmem:[%s2 + $0x18] sm:$0xff]
    %vm396 = vcmask 261120
    %v398 = vsel %vm396, %v29, 0
    %v401 = vsel %vm396, %v30, 0
    %v404 = vsel %vm396, %v31, 0
    %v407 = vsel %vm396, %v32, 0
    %409 = vmatprep.subr.mxu0 0.0
    %410 = vmatpush1.msra.mxu0 %v204
    %411 = vmatprep.subr.mxu0 0.0
    %412 = vmatpush1.msra.mxu0 %v209
    %413 = vmatprep.subr.mxu0 0.0
    %414 = vmatpush1.msra.mxu0 %v214
    %415 = vmatprep.subr.mxu0 0.0
    %416 = vmatpush1.msra.mxu0 %v219
    %417 = vmatprep.subr.mxu0 0.0
    %418 = vmatpush1.msra.mxu0 0.0
    %419 = vmatprep.subr.mxu0 0.0
    %420 = vmatpush1.msra.mxu0 0.0
    %421 = vmatprep.subr.mxu0 0.0
    %422 = vmatpush1.msra.mxu0 0.0
    %423 = vmatprep.subr.mxu0 0.0
    %424 = vmatpush1.msra.mxu0 0.0
    %425 = vmatprep.subr.mxu0 0.0
    %426 = vmatpush1.msra.mxu0 0.0
    %427 = vmatprep.subr.mxu0 0.0
    %428 = vmatpush1.msra.mxu0 0.0
    %429 = vmatprep.subr.mxu0 0.0
    %430 = vmatpush1.msra.mxu0 0.0
    %431 = vmatprep.subr.mxu0 0.0
    %432 = vmatpush1.msra.mxu0 0.0
    %433 = vmatprep.subr.mxu0 0.0
    %434 = vmatpush1.msra.mxu0 0.0
    %435 = vmatprep.subr.mxu0 0.0
    %436 = vmatpush1.msra.mxu0 0.0
    %437 = vmatprep.subr.mxu0 0.0
    %438 = vmatpush1.msra.mxu0 0.0
    %439 = vmatprep.subr.mxu0 0.0
    %440 = vmatpush1.msra.mxu0 0.0
    %441 = vmatprep.subr.mxu0 0.0
    %442 = vmatpush1.msra.mxu0 0.0
    %443 = vmatprep.subr.mxu0 0.0
    %444 = vmatpush1.msra.mxu0 0.0
    %445 = vmatprep.subr.mxu0 0.0
    %446 = vmatpush1.msra.mxu0 0.0
    %447 = vmatprep.subr.mxu0 0.0
    %448 = vmatpush1.msra.mxu0 0.0
    %449 = vmatprep.subr.mxu0 0.0
    %450 = vmatpush1.msra.mxu0 0.0
    %451 = vmatprep.subr.mxu0 0.0
    %452 = vmatpush1.msra.mxu0 0.0
    %453 = vmatprep.subr.mxu0 0.0
    %454 = vmatpush1.msra.mxu0 0.0
    %455 = vmatprep.subr.mxu0 0.0
    %456 = vmatpush1.msra.mxu0 0.0
    %457 = vmatprep.subr.mxu0 0.0
    %458 = vmatpush1.msra.mxu0 0.0
    %459 = vmatprep.subr.mxu0 0.0
    %460 = vmatpush1.msra.mxu0 0.0
    %461 = vmatprep.subr.mxu0 0.0
    %462 = vmatpush1.msra.mxu0 0.0
    %463 = vmatprep.subr.mxu0 0.0
    %464 = vmatpush1.msra.mxu0 0.0
    %465 = vmatprep.subr.mxu0 0.0
    %466 = vmatpush1.msra.mxu0 0.0
    %467 = vmatprep.subr.mxu0 0.0
    %468 = vmatpush1.msra.mxu0 0.0
    %469 = vmatprep.subr.mxu0 0.0
    %470 = vmatpush1.msra.mxu0 0.0
    %471 = vmatprep.subr.mxu0 0.0
    %472 = vmatpush1.msra.mxu0 0.0
    %473 = vmatprep.mubr.f32.mxu0 0.0
    %474 = vmatmul.mubr.f32.gmra.mrb[0].mxu0 %v398
    %v475 = vpop.f32.mrb[0].mxu0
    %v476 = vadd.f32 0.0, %v475
    %v477 = vpop.f32.mrb[0].mxu0
    %478 = vmatprep.mubr.f32.mxu0 0.0
    %479 = vmatmul.mubr.f32.gmra.mrb[0].mxu0 %v401
    %v480 = vpop.f32.mrb[0].mxu0
    %v481 = vadd.f32 0.0, %v480
    %v482 = vpop.f32.mrb[0].mxu0
    %483 = vmatprep.mubr.f32.mxu0 0.0
    %484 = vmatmul.mubr.f32.gmra.mrb[0].mxu0 %v404
    %v485 = vpop.f32.mrb[0].mxu0
    %v486 = vadd.f32 0.0, %v485
    %v487 = vpop.f32.mrb[0].mxu0
    %488 = vmatprep.mubr.f32.mxu0 0.0
    %489 = vmatmul.mubr.f32.gmra.mrb[0].mxu0 %v407
    %v490 = vpop.f32.mrb[0].mxu0
    %v491 = vadd.f32 0.0, %v490
    %v492 = vpop.f32.mrb[0].mxu0
    %493 = vdwg.mxu0
    %v494 = vmul.f32 %v476, 0.001953125
    %v495 = vmul.f32 %v481, 0.001953125
    %v496 = vmul.f32 %v486, 0.001953125
    %v497 = vmul.f32 %v491, 0.001953125
    %498 = vmatprep.subr.mxu0 0.0
    %499 = vmatpush1.msra.mxu0 %v374
    %500 = vmatprep.subr.mxu0 0.0
    %501 = vmatpush1.msra.mxu0 %v379
    %502 = vmatprep.subr.mxu0 0.0
    %503 = vmatpush1.msra.mxu0 %v384
    %504 = vmatprep.subr.mxu0 0.0
    %505 = vmatpush1.msra.mxu0 %v389
    %506 = vmatprep.subr.mxu0 0.0
    %507 = vmatpush1.msra.mxu0 0.0
    %508 = vmatprep.subr.mxu0 0.0
    %509 = vmatpush1.msra.mxu0 0.0
    %510 = vmatprep.subr.mxu0 0.0
    %511 = vmatpush1.msra.mxu0 0.0
    %512 = vmatprep.subr.mxu0 0.0
    %513 = vmatpush1.msra.mxu0 0.0
    %514 = vmatprep.subr.mxu0 0.0
    %515 = vmatpush1.msra.mxu0 0.0
    %516 = vmatprep.subr.mxu0 0.0
    %517 = vmatpush1.msra.mxu0 0.0
    %518 = vmatprep.subr.mxu0 0.0
    %519 = vmatpush1.msra.mxu0 0.0
    %520 = vmatprep.subr.mxu0 0.0
    %521 = vmatpush1.msra.mxu0 0.0
    %522 = vmatprep.subr.mxu0 0.0
    %523 = vmatpush1.msra.mxu0 0.0
    %524 = vmatprep.subr.mxu0 0.0
    %525 = vmatpush1.msra.mxu0 0.0
    %526 = vmatprep.subr.mxu0 0.0
    %527 = vmatpush1.msra.mxu0 0.0
    %528 = vmatprep.subr.mxu0 0.0
    %529 = vmatpush1.msra.mxu0 0.0
    %530 = vmatprep.subr.mxu0 0.0
    %531 = vmatpush1.msra.mxu0 0.0
    %532 = vmatprep.subr.mxu0 0.0
    %533 = vmatpush1.msra.mxu0 0.0
    %534 = vmatprep.subr.mxu0 0.0
    %535 = vmatpush1.msra.mxu0 0.0
    %536 = vmatprep.subr.mxu0 0.0
    %537 = vmatpush1.msra.mxu0 0.0
    %538 = vmatprep.subr.mxu0 0.0
    %539 = vmatpush1.msra.mxu0 0.0
    %540 = vmatprep.subr.mxu0 0.0
    %541 = vmatpush1.msra.mxu0 0.0
    %542 = vmatprep.subr.mxu0 0.0
    %543 = vmatpush1.msra.mxu0 0.0
    %544 = vmatprep.subr.mxu0 0.0
    %545 = vmatpush1.msra.mxu0 0.0
    %546 = vmatprep.subr.mxu0 0.0
    %547 = vmatpush1.msra.mxu0 0.0
    %548 = vmatprep.subr.mxu0 0.0
    %549 = vmatpush1.msra.mxu0 0.0
    %550 = vmatprep.subr.mxu0 0.0
    %551 = vmatpush1.msra.mxu0 0.0
    %552 = vmatprep.subr.mxu0 0.0
    %553 = vmatpush1.msra.mxu0 0.0
    %554 = vmatprep.subr.mxu0 0.0
    %555 = vmatpush1.msra.mxu0 0.0
    %556 = vmatprep.subr.mxu0 0.0
    %557 = vmatpush1.msra.mxu0 0.0
    %558 = vmatprep.subr.mxu0 0.0
    %559 = vmatpush1.msra.mxu0 0.0
    %560 = vmatprep.subr.mxu0 0.0
    %561 = vmatpush1.msra.mxu0 0.0
    %562 = vmatprep.mubr.f32.mxu0 0.0
    %563 = vmatmul.mubr.f32.gmra.mrb[0].mxu0 %v398
    %v564 = vpop.f32.mrb[0].mxu0
    %v565 = vadd.f32 0.0, %v564
    %v566 = vpop.f32.mrb[0].mxu0
    %567 = vmatprep.mubr.f32.mxu0 0.0
    %568 = vmatmul.mubr.f32.gmra.mrb[0].mxu0 %v401
    %v569 = vpop.f32.mrb[0].mxu0
    %v570 = vadd.f32 0.0, %v569
    %v571 = vpop.f32.mrb[0].mxu0
    %572 = vmatprep.mubr.f32.mxu0 0.0
    %573 = vmatmul.mubr.f32.gmra.mrb[0].mxu0 %v404
    %v574 = vpop.f32.mrb[0].mxu0
    %v575 = vadd.f32 0.0, %v574
    %v576 = vpop.f32.mrb[0].mxu0
    %577 = vmatprep.mubr.f32.mxu0 0.0
    %578 = vmatmul.mubr.f32.gmra.mrb[0].mxu0 %v407
    %v579 = vpop.f32.mrb[0].mxu0
    %v580 = vadd.f32 0.0, %v579
    %v581 = vpop.f32.mrb[0].mxu0
    %582 = vdwg.mxu0
    %v583 = vmul.f32 %v565, %v29
    %v584 = vmul.f32 %v570, %v30
    %v585 = vmul.f32 %v575, %v31
    %v586 = vmul.f32 %v580, %v32
    %v587 = vsel %vm396, %v583, 0.0
    %588 = vadd.xlane.f32.xlu0 %v587
    %v589 = vpop.xlane.xlu0 %588
    %v590 = vsel %vm396, %v584, 0.0
    %591 = vadd.xlane.f32.xlu0 %v590
    %v592 = vpop.xlane.xlu0 %591
    %v593 = vsel %vm396, %v585, 0.0
    %594 = vadd.xlane.f32.xlu0 %v593
    %v595 = vpop.xlane.xlu0 %594
    %v596 = vsel %vm396, %v586, 0.0
    %597 = vadd.xlane.f32.xlu0 %v596
    %v598 = vpop.xlane.xlu0 %597
    %v599 = vmul.f32 %v589, 0.001953125
    %v600 = vmul.f32 %v592, 0.001953125
    %v601 = vmul.f32 %v595, 0.001953125
    %v602 = vmul.f32 %v598, 0.001953125
    %v603 = vmul.f32 %v494, %v494
    %v604 = vmul.f32 %v495, %v495
    %v605 = vmul.f32 %v496, %v496
    %v606 = vmul.f32 %v497, %v497
    %v607 = vsub.f32 %v599, %v603
    %v608 = vsub.f32 %v600, %v604
    %v609 = vsub.f32 %v601, %v605
    %v610 = vsub.f32 %v602, %v606
    %v611 = vmax.f32 %v607, 0.0
    %v612 = vmax.f32 %v608, 0.0
    %v613 = vmax.f32 %v609, 0.0
    %v614 = vmax.f32 %v610, 0.0
    %v615 = vadd.f32 %v611, 1e-05
    %v616 = vadd.f32 %v612, 1e-05
    %v617 = vadd.f32 %v613, 1e-05
    %v618 = vadd.f32 %v614, 1e-05
    %v619 = vrsqrt.pop %v615
    %v620 = vrsqrt.pop %v616
    %v621 = vrsqrt.pop %v617
    %v622 = vrsqrt.pop %v618
    %v623 = vmul.f32 %v392, %v619
    %v624 = vmul.f32 %v393, %v620
    %v625 = vmul.f32 %v394, %v621
    %v626 = vmul.f32 %v395, %v622
    %v627 = vmul.f32 %v494, %v623
    %v628 = vmul.f32 %v495, %v624
    %v629 = vmul.f32 %v496, %v625
    %v630 = vmul.f32 %v497, %v626
    %635 = vrot.lane.b32.xlu0 %v627, 1
    %v636 = vpop.permute.xlu0 %635
    %637 = vrot.lane.b32.xlu0 %v628, 1
    %v638 = vpop.permute.xlu0 %637
    %639 = vrot.lane.b32.xlu0 %v629, 1
    %v640 = vpop.permute.xlu0 %639
    %641 = vrot.lane.b32.xlu0 %v630, 1
    %v642 = vpop.permute.xlu0 %641
    %v647 = vsub.f32 %v392, %v636
    %v648 = vsub.f32 %v393, %v638
    %v649 = vsub.f32 %v394, %v640
    %v650 = vsub.f32 %v395, %v642
    %651 = vmatprep.subr.mxu0 %v34
    %652 = vmatpush1.msra.mxu0 %v33
    %653 = vmatprep.subr.mxu0 %v36
    %654 = vmatpush1.msra.mxu0 %v35
    %655 = vmatprep.subr.mxu0 %v38
    %656 = vmatpush1.msra.mxu0 %v37
    %657 = vmatprep.subr.mxu0 %v40
    %658 = vmatpush1.msra.mxu0 %v39
    %659 = vmatprep.subr.mxu0 0.0
    %660 = vmatpush1.msra.mxu0 0.0
    %661 = vmatprep.subr.mxu0 0.0
    %662 = vmatpush1.msra.mxu0 0.0
    %663 = vmatprep.subr.mxu0 0.0
    %664 = vmatpush1.msra.mxu0 0.0
    %665 = vmatprep.subr.mxu0 0.0
    %666 = vmatpush1.msra.mxu0 0.0
    %667 = vmatprep.subr.mxu0 0.0
    %668 = vmatpush1.msra.mxu0 0.0
    %669 = vmatprep.subr.mxu0 0.0
    %670 = vmatpush1.msra.mxu0 0.0
    %671 = vmatprep.subr.mxu0 0.0
    %672 = vmatpush1.msra.mxu0 0.0
    %673 = vmatprep.subr.mxu0 0.0
    %674 = vmatpush1.msra.mxu0 0.0
    %675 = vmatprep.subr.mxu0 0.0
    %676 = vmatpush1.msra.mxu0 0.0
    %677 = vmatprep.subr.mxu0 0.0
    %678 = vmatpush1.msra.mxu0 0.0
    %679 = vmatprep.subr.mxu0 0.0
    %680 = vmatpush1.msra.mxu0 0.0
    %681 = vmatprep.subr.mxu0 0.0
    %682 = vmatpush1.msra.mxu0 0.0
    %683 = vmatprep.subr.mxu0 0.0
    %684 = vmatpush1.msra.mxu0 0.0
    %685 = vmatprep.subr.mxu0 0.0
    %686 = vmatpush1.msra.mxu0 0.0
    %687 = vmatprep.subr.mxu0 0.0
    %688 = vmatpush1.msra.mxu0 0.0
    %689 = vmatprep.subr.mxu0 0.0
    %690 = vmatpush1.msra.mxu0 0.0
    %691 = vmatprep.subr.mxu0 0.0
    %692 = vmatpush1.msra.mxu0 0.0
    %693 = vmatprep.subr.mxu0 0.0
    %694 = vmatpush1.msra.mxu0 0.0
    %695 = vmatprep.subr.mxu0 0.0
    %696 = vmatpush1.msra.mxu0 0.0
    %697 = vmatprep.subr.mxu0 0.0
    %698 = vmatpush1.msra.mxu0 0.0
    %699 = vmatprep.subr.mxu0 0.0
    %700 = vmatpush1.msra.mxu0 0.0
    %701 = vmatprep.subr.mxu0 0.0
    %702 = vmatpush1.msra.mxu0 0.0
    %703 = vmatprep.subr.mxu0 0.0
    %704 = vmatpush1.msra.mxu0 0.0
    %705 = vmatprep.subr.mxu0 0.0
    %706 = vmatpush1.msra.mxu0 0.0
    %707 = vmatprep.subr.mxu0 0.0
    %708 = vmatpush1.msra.mxu0 0.0
    %709 = vmatprep.subr.mxu0 0.0
    %710 = vmatpush1.msra.mxu0 0.0
    %711 = vmatprep.subr.mxu0 0.0
    %712 = vmatpush1.msra.mxu0 0.0
    %713 = vmatprep.subr.mxu0 0.0
    %714 = vmatpush1.msra.mxu0 0.0
    %715 = vmatprep.mubr.f32.mxu0 0.0
    %716 = vmatmul.mubr.f32.gmra.mrb[0].mxu0 %v398
    %v717 = vpop.f32.mrb[0].mxu0
    %v718 = vadd.f32 0.0, %v717
    %v719 = vpop.f32.mrb[0].mxu0
    %v720 = vadd.f32 0.0, %v719
    %721 = vmatprep.mubr.f32.mxu0 0.0
    %722 = vmatmul.mubr.f32.gmra.mrb[0].mxu0 %v401
    %v723 = vpop.f32.mrb[0].mxu0
    %v724 = vadd.f32 0.0, %v723
    %v725 = vpop.f32.mrb[0].mxu0
    %v726 = vadd.f32 0.0, %v725
    %727 = vmatprep.mubr.f32.mxu0 0.0
    %728 = vmatmul.mubr.f32.gmra.mrb[0].mxu0 %v404
    %v729 = vpop.f32.mrb[0].mxu0
    %v730 = vadd.f32 0.0, %v729
    %v731 = vpop.f32.mrb[0].mxu0
    %v732 = vadd.f32 0.0, %v731
    %733 = vmatprep.mubr.f32.mxu0 0.0
    %734 = vmatmul.mubr.f32.gmra.mrb[0].mxu0 %v407
    %v735 = vpop.f32.mrb[0].mxu0
    %v736 = vadd.f32 0.0, %v735
    %v737 = vpop.f32.mrb[0].mxu0
    %v738 = vadd.f32 0.0, %v737
    %739 = vdwg.mxu0
    %741 = vset.pattern.permute.xlu0 0
    %742 = vperm.xlu0 %741, %v623
    %v743 = vpop.permute.xlu0 %742
    %746 = vset.pattern.permute.xlu0 0
    %747 = vperm.xlu0 %746, %v624
    %v748 = vpop.permute.xlu0 %747
    %751 = vset.pattern.permute.xlu0 0
    %752 = vperm.xlu0 %751, %v625
    %v753 = vpop.permute.xlu0 %752
    %756 = vset.pattern.permute.xlu0 0
    %757 = vperm.xlu0 %756, %v626
    %v758 = vpop.permute.xlu0 %757
    %v760 = vmul.f32 %v718, %v743
    %v761 = vmul.f32 %v720, %v743
    %v762 = vmul.f32 %v724, %v748
    %v763 = vmul.f32 %v726, %v748
    %v764 = vmul.f32 %v730, %v753
    %v765 = vmul.f32 %v732, %v753
    %v766 = vmul.f32 %v736, %v758
    %v767 = vmul.f32 %v738, %v758
    %v768 = vadd.f32 %v33, %v760
    %v769 = vadd.f32 %v34, %v761
    %v770 = vadd.f32 %v35, %v762
    %v771 = vadd.f32 %v36, %v763
    %v772 = vadd.f32 %v37, %v764
    %v773 = vadd.f32 %v38, %v765
    %v774 = vadd.f32 %v39, %v766
    %v775 = vadd.f32 %v40, %v767
    %777 = vset.pattern.permute.xlu0 1
    %778 = vperm.xlu0 %777, %v647
    %v779 = vpop.permute.xlu0 %778
    %782 = vset.pattern.permute.xlu0 1
    %783 = vperm.xlu0 %782, %v648
    %v784 = vpop.permute.xlu0 %783
    %787 = vset.pattern.permute.xlu0 1
    %788 = vperm.xlu0 %787, %v649
    %v789 = vpop.permute.xlu0 %788
    %792 = vset.pattern.permute.xlu0 1
    %793 = vperm.xlu0 %792, %v650
    %v794 = vpop.permute.xlu0 %793
    %v796 = vadd.f32 %v768, %v779
    %v797 = vadd.f32 %v769, %v779
    %v798 = vadd.f32 %v770, %v784
    %v799 = vadd.f32 %v771, %v784
    %v800 = vadd.f32 %v772, %v789
    %v801 = vadd.f32 %v773, %v789
    %v802 = vadd.f32 %v774, %v794
    %v803 = vadd.f32 %v775, %v794
    %v804 = vmax.f32 %v796, 0.0
    %v805 = vmax.f32 %v797, 0.0
    %v806 = vmax.f32 %v798, 0.0
    %v807 = vmax.f32 %v799, 0.0
    %v808 = vmax.f32 %v800, 0.0
    %v809 = vmax.f32 %v801, 0.0
    %v810 = vmax.f32 %v802, 0.0
    %v811 = vmax.f32 %v803, 0.0
    %812 = vst [vmem:[#allocation5] sm:$0xff] %v804
    %813 = vst [vmem:[#allocation5 + $0x8] sm:$0xff] %v805
    %814 = vst [vmem:[#allocation5 + $0x10] sm:$0xff] %v806
    %815 = vst [vmem:[#allocation5 + $0x18] sm:$0xff] %v807
    %816 = vst [vmem:[#allocation5 + $0x20] sm:$0xff] %v808
    %817 = vst [vmem:[#allocation5 + $0x28] sm:$0xff] %v809
    %818 = vst [vmem:[#allocation5 + $0x30] sm:$0xff] %v810
    %819 = vst [vmem:[#allocation5 + $0x38] sm:$0xff] %v811
    %v820 = vld [vmem:[%s43] sm:$0xff]
    %v821 = vld [vmem:[%s43 + $0x8] sm:$0xff]
    %v822 = vld [vmem:[%s43 + $0x10] sm:$0xff]
    %v823 = vld [vmem:[%s43 + $0x18] sm:$0xff]
    %v824 = vld [vmem:[%s43 + $0x20] sm:$0xff]
    %v825 = vld [vmem:[%s43 + $0x28] sm:$0xff]
    %v826 = vld [vmem:[%s43 + $0x30] sm:$0xff]
    %v827 = vld [vmem:[%s43 + $0x38] sm:$0xff]
    %828 = vmatprep.subr.mxu0 %v821
    %829 = vmatpush1.msra.mxu0 %v820
    %830 = vmatprep.subr.mxu0 %v823
    %831 = vmatpush1.msra.mxu0 %v822
    %832 = vmatprep.subr.mxu0 %v825
    %833 = vmatpush1.msra.mxu0 %v824
    %834 = vmatprep.subr.mxu0 %v827
    %835 = vmatpush1.msra.mxu0 %v826
    %836 = vmatprep.subr.mxu0 0.0
    %837 = vmatpush1.msra.mxu0 0.0
    %838 = vmatprep.subr.mxu0 0.0
    %839 = vmatpush1.msra.mxu0 0.0
    %840 = vmatprep.subr.mxu0 0.0
    %841 = vmatpush1.msra.mxu0 0.0
    %842 = vmatprep.subr.mxu0 0.0
    %843 = vmatpush1.msra.mxu0 0.0
    %844 = vmatprep.subr.mxu0 0.0
    %845 = vmatpush1.msra.mxu0 0.0
    %846 = vmatprep.subr.mxu0 0.0
    %847 = vmatpush1.msra.mxu0 0.0
    %848 = vmatprep.subr.mxu0 0.0
    %849 = vmatpush1.msra.mxu0 0.0
    %850 = vmatprep.subr.mxu0 0.0
    %851 = vmatpush1.msra.mxu0 0.0
    %852 = vmatprep.subr.mxu0 0.0
    %853 = vmatpush1.msra.mxu0 0.0
    %854 = vmatprep.subr.mxu0 0.0
    %855 = vmatpush1.msra.mxu0 0.0
    %856 = vmatprep.subr.mxu0 0.0
    %857 = vmatpush1.msra.mxu0 0.0
    %858 = vmatprep.subr.mxu0 0.0
    %859 = vmatpush1.msra.mxu0 0.0
    %860 = vmatprep.subr.mxu0 0.0
    %861 = vmatpush1.msra.mxu0 0.0
    %862 = vmatprep.subr.mxu0 0.0
    %863 = vmatpush1.msra.mxu0 0.0
    %864 = vmatprep.subr.mxu0 0.0
    %865 = vmatpush1.msra.mxu0 0.0
    %866 = vmatprep.subr.mxu0 0.0
    %867 = vmatpush1.msra.mxu0 0.0
    %868 = vmatprep.subr.mxu0 0.0
    %869 = vmatpush1.msra.mxu0 0.0
    %870 = vmatprep.subr.mxu0 0.0
    %871 = vmatpush1.msra.mxu0 0.0
    %872 = vmatprep.subr.mxu0 0.0
    %873 = vmatpush1.msra.mxu0 0.0
    %874 = vmatprep.subr.mxu0 0.0
    %875 = vmatpush1.msra.mxu0 0.0
    %876 = vmatprep.subr.mxu0 0.0
    %877 = vmatpush1.msra.mxu0 0.0
    %878 = vmatprep.subr.mxu0 0.0
    %879 = vmatpush1.msra.mxu0 0.0
    %880 = vmatprep.subr.mxu0 0.0
    %881 = vmatpush1.msra.mxu0 0.0
    %882 = vmatprep.subr.mxu0 0.0
    %883 = vmatpush1.msra.mxu0 0.0
    %884 = vmatprep.subr.mxu0 0.0
    %885 = vmatpush1.msra.mxu0 0.0
    %886 = vmatprep.subr.mxu0 0.0
    %887 = vmatpush1.msra.mxu0 0.0
    %888 = vmatprep.subr.mxu0 0.0
    %889 = vmatpush1.msra.mxu0 0.0
    %890 = vmatprep.subr.mxu0 0.0
    %891 = vmatpush1.msra.mxu0 0.0
    %892 = vmatprep.mubr.f32.mxu0 0.0
    %893 = vmatmul.mubr.f32.gmra.mrb[0].mxu0 %v398
    %v894 = vpop.f32.mrb[0].mxu0
    %v895 = vadd.f32 0.0, %v894
    %v896 = vpop.f32.mrb[0].mxu0
    %v897 = vadd.f32 0.0, %v896
    %898 = vmatprep.mubr.f32.mxu0 0.0
    %899 = vmatmul.mubr.f32.gmra.mrb[0].mxu0 %v401
    %v900 = vpop.f32.mrb[0].mxu0
    %v901 = vadd.f32 0.0, %v900
    %v902 = vpop.f32.mrb[0].mxu0
    %v903 = vadd.f32 0.0, %v902
    %904 = vmatprep.mubr.f32.mxu0 0.0
    %905 = vmatmul.mubr.f32.gmra.mrb[0].mxu0 %v404
    %v906 = vpop.f32.mrb[0].mxu0
    %v907 = vadd.f32 0.0, %v906
    %v908 = vpop.f32.mrb[0].mxu0
    %v909 = vadd.f32 0.0, %v908
    %910 = vmatprep.mubr.f32.mxu0 0.0
    %911 = vmatmul.mubr.f32.gmra.mrb[0].mxu0 %v407
    %v912 = vpop.f32.mrb[0].mxu0
    %v913 = vadd.f32 0.0, %v912
    %v914 = vpop.f32.mrb[0].mxu0
    %v915 = vadd.f32 0.0, %v914
    %916 = vdwg.mxu0
    %v917 = vmul.f32 %v895, %v743
    %v918 = vmul.f32 %v897, %v743
    %v919 = vmul.f32 %v901, %v748
    %v920 = vmul.f32 %v903, %v748
    %v921 = vmul.f32 %v907, %v753
    %v922 = vmul.f32 %v909, %v753
    %v923 = vmul.f32 %v913, %v758
    %v924 = vmul.f32 %v915, %v758
    %v925 = vadd.f32 %v820, %v917
    %v926 = vadd.f32 %v821, %v918
    %v927 = vadd.f32 %v822, %v919
    %v928 = vadd.f32 %v823, %v920
    %v929 = vadd.f32 %v824, %v921
    %v930 = vadd.f32 %v825, %v922
    %v931 = vadd.f32 %v826, %v923
    %v932 = vadd.f32 %v827, %v924
    %v933 = vadd.f32 %v925, %v779
    %v934 = vadd.f32 %v926, %v779
    %v935 = vadd.f32 %v927, %v784
    %v936 = vadd.f32 %v928, %v784
    %v937 = vadd.f32 %v929, %v789
    %v938 = vadd.f32 %v930, %v789
    %v939 = vadd.f32 %v931, %v794
    %v940 = vadd.f32 %v932, %v794
    %v941 = vmax.f32 %v933, 0.0
    %v942 = vmax.f32 %v934, 0.0
    %v943 = vmax.f32 %v935, 0.0
    %v944 = vmax.f32 %v936, 0.0
    %v945 = vmax.f32 %v937, 0.0
    %v946 = vmax.f32 %v938, 0.0
    %v947 = vmax.f32 %v939, 0.0
    %v948 = vmax.f32 %v940, 0.0
    %s949 = smul.addr %s41, 8
    %s950 = scalar_lea.vmem [#allocation5], %s949
    %951 = vst [vmem:[%s950] sm:$0xff] %v941
    %952 = vst [vmem:[%s950 + $0x8] sm:$0xff] %v942
    %953 = vst [vmem:[%s950 + $0x10] sm:$0xff] %v943
    %954 = vst [vmem:[%s950 + $0x18] sm:$0xff] %v944
    %955 = vst [vmem:[%s950 + $0x20] sm:$0xff] %v945
    %956 = vst [vmem:[%s950 + $0x28] sm:$0xff] %v946
    %957 = vst [vmem:[%s950 + $0x30] sm:$0xff] %v947
    %958 = vst [vmem:[%s950 + $0x38] sm:$0xff] %v948
    // Predicated region
    $region18: #{tpu_custom_call.1} parent=1 // pred_check
      _
    $region19: #{tpu_custom_call.1} parent=1 // pred_check_branch
      %960 = sbr.rel (0) target = $region21
    $region20: #{tpu_custom_call.1} parent=1 // pred_region
      %s962 = ssub.s32 2048, 2048
      %963 = vsyncadd [#allocation4], %s962
      %s964 = sshll.u32 [#allocation5], 4
      %s965 = int_to_ptr.vmem [resolvable:$true] %s964
      %970 = dma.vmem_to_hbm [thread:$0]  %s965, 2048, %s3, [#allocation4], 256, 256, 16
    $region21: #{tpu_custom_call.1} parent=1 // pred_fallthru
      _
    // Predicated region
    $region22: #{tpu_custom_call.1} parent=1 // pred_check
      _
    $region23: #{tpu_custom_call.1} parent=1 // pred_check_branch
      %972 = sbr.rel (0) target = $region25
    $region24: #{tpu_custom_call.1} parent=1 // pred_region
      %973 = dma.done [#allocation4], 2048
    $region25: #{tpu_custom_call.1} parent=1 // pred_fallthru
      _
    %974 = vsyncpa [#allocation3], 1
    %975 = vsyncpa [#allocation4], 1

</llo_original>
